<compile_context>
chip_gen: v7x
topology: tpu7x:2x2x1
jax: 0.10.0
libtpu: 0.0.40
codegen_flags: <defaults>
</compile_context>

<pallas_src>
import functools

import jax
import jax.numpy as jnp
from jax import lax
from jax.experimental import pallas as pl
from jax.experimental.pallas import tpu as pltpu


def _gemm_bias_kernel(p_ref, w_ref, b_ref, o_ref, *, nb):
    """One grid step: o[i] = W @ patches[i] + bias, for i in [0, nb).

    p_ref: (Nb, K, Ts)      im2col patches (K = KH*KW*Cin on sublanes, spatial on lanes)
    w_ref: (Cout, K)        flattened filter (same small block every step -> stays resident)
    b_ref: (Cout, 1)        bias
    o_ref: (Nb, Cout, Ts)   flattened-NCHW output tile, Ts is a multiple of 128 (lane-dense)
    """
    w = w_ref[...]                      # (Cout, K)
    b = b_ref[...]                      # (Cout, 1) -> lane-broadcast over Ts
    for i in range(nb):                 # static unroll; nb is small by construction
        acc = jnp.dot(w, p_ref[i], preferred_element_type=jnp.float32)   # one MXU pass
        o_ref[i] = (acc + b).astype(o_ref.dtype)                          # bias fused here


def conv_bias_forward(x_nchw, weight_oihw, bias, *, stride, padding,
                      operand_dtype=None, spatial_tile=1024,
                      vmem_block_budget_bytes=2 << 20):
    """Forward pass equivalent to nn.Conv2d(inp, oup, kernel, stride, padding, bias=True).

    x_nchw:      (N, Cin, H, W)    float32 (NCHW, same as PyTorch)
    weight_oihw: (Cout, Cin, KH, KW)
    bias:        (Cout,)
    operand_dtype: optionally jnp.bfloat16 on v6e/v7x (f32 accumulation is kept).
    returns:     (N, Cout, OH, OW)
    """
    n, cin, h, w = x_nchw.shape
    cout, _, kh, kw = weight_oihw.shape
    sh = sw = int(stride)
    ph = pw = int(padding)

    oh = (h + 2 * ph - kh) // sh + 1
    ow = (w + 2 * pw - kw) // sw + 1
    s = oh * ow
    k = kh * kw * cin

    # ---- glue (plain XLA): spatial zero-pad + im2col gather; no layout transpose ----
    x_pad = jnp.pad(x_nchw, ((0, 0), (0, 0), (ph, ph), (pw, pw)))   # (N, Cin, Hp, Wp)
    taps = []
    for ih in range(kh):
        for iw in range(kw):
            taps.append(lax.slice(
                x_pad,
                (0, 0, ih, iw),
                (n, cin, ih + sh * (oh - 1) + 1, iw + sw * (ow - 1) + 1),
                (1, 1, sh, sw)))                                    # (N, Cin, OH, OW)
    patches = jnp.stack(taps, axis=1)                               # (N, KH*KW, Cin, OH, OW)
    patches = patches.reshape(n, k, s)                              # K order = (kh, kw, cin)

    # Filter flattened with the SAME K ordering; bias as (Cout, 1) column.
    w2d = jnp.transpose(weight_oihw, (0, 2, 3, 1)).reshape(cout, k)  # (Cout, K)
    b2d = bias.reshape(cout, 1).astype(jnp.float32)

    if operand_dtype is not None:           # bf16 MXU operands on v6e/v7x; acc stays f32
        patches = patches.astype(operand_dtype)
        w2d = w2d.astype(operand_dtype)

    # ---- lane-dense spatial tiling: pad S up to a multiple of a >=128-wide tile ----
    s128 = ((s + 127) // 128) * 128
    ts = max(128, (min(spatial_tile, s128) // 128) * 128)
    s_pad = ((s128 + ts - 1) // ts) * ts
    if s_pad != s:
        patches = jnp.pad(patches, ((0, 0), (0, 0), (0, s_pad - s)))

    # ---- batch block: pack several batch elements per grid step, bounded by VMEM ----
    itemsize = jnp.dtype(patches.dtype).itemsize
    nb = max(1, min(n, vmem_block_budget_bytes // max(1, k * ts * itemsize)))
    while n % nb:
        nb -= 1

    kernel = functools.partial(_gemm_bias_kernel, nb=nb)

    out_flat = pl.pallas_call(
        kernel,
        out_shape=jax.ShapeDtypeStruct((n, cout, s_pad), x_nchw.dtype),
        grid_spec=pltpu.PrefetchScalarGridSpec(
            num_scalar_prefetch=0,
            grid=(n // nb, s_pad // ts),
            in_specs=[
                pl.BlockSpec((nb, k, ts), lambda b, j: (b, 0, j)),
                pl.BlockSpec((cout, k), lambda b, j: (0, 0)),
                pl.BlockSpec((cout, 1), lambda b, j: (0, 0)),
            ],
            out_specs=pl.BlockSpec((nb, cout, ts), lambda b, j: (b, 0, j)),
        ),
        compiler_params=pltpu.CompilerParams(
            dimension_semantics=("parallel", "parallel")),
    )(patches, w2d, b2d)

    out_flat = out_flat[:, :, :s]                # drop spatial padding lanes (if any)
    return out_flat.reshape(n, cout, oh, ow)     # free reshape: already NCHW-flattened


if __name__ == "__main__":
    # Module config: conv_bias(inp=4, oup=8, kernel=3, stride=1, padding=1)
    inp, oup, kernel_size, stride, padding = 4, 8, 3, 1, 1
    N, H, W = 2, 16, 16

    key = jax.random.PRNGKey(0)
    kx, kw_, kb = jax.random.split(key, 3)

    x = jax.random.normal(kx, (N, inp, H, W), dtype=jnp.float32)
    # Deterministic parameter init (synthetic; mimics Conv2d shapes, not a checkpoint).
    fan_in = inp * kernel_size * kernel_size
    bound = 1.0 / (fan_in ** 0.5)
    weight = jax.random.uniform(kw_, (oup, inp, kernel_size, kernel_size),
                                dtype=jnp.float32, minval=-bound, maxval=bound)
    bias = jax.random.uniform(kb, (oup,), dtype=jnp.float32,
                              minval=-bound, maxval=bound)

    out = conv_bias_forward(x, weight, bias, stride=stride, padding=padding)
    out = jax.block_until_ready(out)

    # Reference check against XLA conv (same semantics as torch.nn.Conv2d).
    ref = lax.conv_general_dilated(
        x, weight, window_strides=(stride, stride),
        padding=[(padding, padding), (padding, padding)],
        dimension_numbers=("NCHW", "OIHW", "NCHW"))
    ref = ref + bias.reshape(1, oup, 1, 1)
    assert out.shape == (N, oup, H, W)
    assert jnp.allclose(out, ref, atol=1e-4, rtol=1e-4)

    print("KERNEL_OK")
</pallas_src>

<mosaic_0001>
module attributes {stable_mosaic.version = 11 : i64} {
  func.func @_gemm_bias_kernel(%arg0: i32, %arg1: i32, %arg2: memref<2x36x256xf32, #tpu.memory_space<vmem>>, %arg3: memref<8x36xf32, #tpu.memory_space<vmem>>, %arg4: memref<8x1xf32, #tpu.memory_space<vmem>>, %arg5: memref<2x8x256xf32, #tpu.memory_space<vmem>>) attributes {dimension_semantics = [#tpu.dimension_semantics<parallel>, #tpu.dimension_semantics<parallel>], iteration_bounds = array<i64: 1, 1>, scalar_prefetch = 0 : i64, scratch_operands = 0 : i64, tpu.core_type = #tpu.core_type<tc>, window_params = [{transform_indices = @transform_0, window_bounds = array<i64: 2, 36, 256>}, {pipeline_mode = #tpu.pipeline_mode<synchronous>, transform_indices = @transform_1, window_bounds = array<i64: 8, 36>}, {pipeline_mode = #tpu.pipeline_mode<synchronous>, transform_indices = @transform_2, window_bounds = array<i64: 8, 1>}, {transform_indices = @transform_3, window_bounds = array<i64: 2, 8, 256>}]} {
    %c0 = arith.constant 0 : index
    %c0_0 = arith.constant 0 : index
    %0 = vector.load %arg3[%c0, %c0_0] : memref<8x36xf32, #tpu.memory_space<vmem>>, vector<8x36xf32>
    %c0_1 = arith.constant 0 : index
    %c0_2 = arith.constant 0 : index
    %1 = vector.load %arg4[%c0_1, %c0_2] : memref<8x1xf32, #tpu.memory_space<vmem>>, vector<8x1xf32>
    %c0_3 = arith.constant 0 : index
    %c0_4 = arith.constant 0 : index
    %c0_5 = arith.constant 0 : index
    %2 = vector.load %arg2[%c0_3, %c0_4, %c0_5] : memref<2x36x256xf32, #tpu.memory_space<vmem>>, vector<1x36x256xf32>
    %3 = vector.shape_cast %2 : vector<1x36x256xf32> to vector<36x256xf32>
    %cst = arith.constant dense<0.000000e+00> : vector<8x256xf32>
    %4 = tpu.matmul %0, %3, %cst {dimension_numbers = #tpu.dot_dimension_numbers<[1], [0], [0], [1], [0, 0, 1, 1], [], []>} : vector<8x36xf32>, vector<36x256xf32>, vector<8x256xf32> -> vector<8x256xf32>
    %5 = vector.broadcast %1 : vector<8x1xf32> to vector<8x256xf32>
    %6 = arith.addf %4, %5 : vector<8x256xf32>
    %c0_6 = arith.constant 0 : index
    %c0_7 = arith.constant 0 : index
    %c0_8 = arith.constant 0 : index
    %7 = vector.load %arg5[%c0_6, %c0_7, %c0_8] : memref<2x8x256xf32, #tpu.memory_space<vmem>>, vector<1x8x256xf32>
    %8 = vector.shape_cast %7 : vector<1x8x256xf32> to vector<8x256xf32>
    %9 = vector.shape_cast %6 : vector<8x256xf32> to vector<1x8x256xf32>
    tpu.vector_store %arg5[%c0_6, %c0_7, %c0_8], %9 {strides = array<i32>} : memref<2x8x256xf32, #tpu.memory_space<vmem>>, vector<1x8x256xf32>,
    %c1 = arith.constant 1 : index
    %c0_9 = arith.constant 0 : index
    %c0_10 = arith.constant 0 : index
    %10 = vector.load %arg2[%c1, %c0_9, %c0_10] : memref<2x36x256xf32, #tpu.memory_space<vmem>>, vector<1x36x256xf32>
    %11 = vector.shape_cast %10 : vector<1x36x256xf32> to vector<36x256xf32>
    %cst_11 = arith.constant dense<0.000000e+00> : vector<8x256xf32>
    %12 = tpu.matmul %0, %11, %cst_11 {dimension_numbers = #tpu.dot_dimension_numbers<[1], [0], [0], [1], [0, 0, 1, 1], [], []>} : vector<8x36xf32>, vector<36x256xf32>, vector<8x256xf32> -> vector<8x256xf32>
    %13 = vector.broadcast %1 : vector<8x1xf32> to vector<8x256xf32>
    %14 = arith.addf %12, %13 : vector<8x256xf32>
    %c1_12 = arith.constant 1 : index
    %c0_13 = arith.constant 0 : index
    %c0_14 = arith.constant 0 : index
    %15 = vector.load %arg5[%c1_12, %c0_13, %c0_14] : memref<2x8x256xf32, #tpu.memory_space<vmem>>, vector<1x8x256xf32>
    %16 = vector.shape_cast %15 : vector<1x8x256xf32> to vector<8x256xf32>
    %17 = vector.shape_cast %14 : vector<8x256xf32> to vector<1x8x256xf32>
    tpu.vector_store %arg5[%c1_12, %c0_13, %c0_14], %17 {strides = array<i32>} : memref<2x8x256xf32, #tpu.memory_space<vmem>>, vector<1x8x256xf32>,
    return
  }
  func.func @transform_0(%arg0: i32, %arg1: i32) -> (i32, i32, i32) {
    %c0_i32 = arith.constant 0 : i32
    %c0_i32_0 = arith.constant 0 : i32
    return %arg0, %c0_i32, %arg1 : i32, i32, i32
  }
  func.func @transform_1(%arg0: i32, %arg1: i32) -> (i32, i32) {
    %c0_i32 = arith.constant 0 : i32
    %c0_i32_0 = arith.constant 0 : i32
    %c0_i32_1 = arith.constant 0 : i32
    return %c0_i32, %c0_i32_0 : i32, i32
  }
  func.func @transform_2(%arg0: i32, %arg1: i32) -> (i32, i32) {
    %c0_i32 = arith.constant 0 : i32
    %c0_i32_0 = arith.constant 0 : i32
    %c0_i32_1 = arith.constant 0 : i32
    return %c0_i32, %c0_i32_0 : i32, i32
  }
  func.func @transform_3(%arg0: i32, %arg1: i32) -> (i32, i32, i32) {
    %c0_i32 = arith.constant 0 : i32
    %c0_i32_0 = arith.constant 0 : i32
    return %arg0, %c0_i32, %arg1 : i32, i32, i32
  }
}

</mosaic_0001>

<llo_original>
// kernel: tpu_custom_call.1
$region0: #{tpu_custom_call.1}
  #allocation0 [shape = 'u32[]', space=smem, size = 0x4, offset = 0x4, fixed_abs, tag = 'smem constant byte address 0x4 - core index']
  #allocation1 [shape = 'u32[144,128]{1,0:T(1,128)}', space=vmem, size = 0x12000, scoped, tag = 'internal scratch']
  %s0 = inlined_call_operand.vmem [shape: f32[2,36,256], index: 0, kind: input, shape index: {}]
  %s1 = inlined_call_operand.vmem [shape: f32[8,36], index: 1, kind: input, shape index: {}]
  %s2 = inlined_call_operand.vmem [shape: f32[8,1], index: 2, kind: input, shape index: {}]
  %s3 = inlined_call_operand.hbm [shape: f32[2,8,256], index: 3, kind: output, shape index: {}]
  %s4 = sld [smem:[#allocation0]]
  $region22: #{tpu_custom_call.1} parent=0
    _
  %s6 = ssub.s32 1, %s4
  %s7 = scalar_select 0, %s6, %s4
  $region1: #{tpu_custom_call.1} parent=0
    #allocation2 [shape = 'u8[16384]{0}', space=vmem, size = 0x4000, scoped, tag = 'output window, operand 0, single buffered']
    #allocation3 [shape = 's32[1]{0}', space=sflag, size = 0x4, scoped, tag = 'scoped memory for tpu_custom_call.1']
    %8 = vsyncpa [#allocation3], 0
    // Predicated region
    $region2: #{tpu_custom_call.1} parent=1 // pred_check
      _
    $region3: #{tpu_custom_call.1} parent=1 // pred_check_branch
      %10 = sbr.rel (0) target = $region5
    $region4: #{tpu_custom_call.1} parent=1 // pred_region
      _
    $region5: #{tpu_custom_call.1} parent=1 // pred_fallthru
      _
    // Predicated region
    $region6: #{tpu_custom_call.1} parent=1 // pred_check
      _
    $region7: #{tpu_custom_call.1} parent=1 // pred_check_branch
      %12 = sbr.rel (0) target = $region9
    $region8: #{tpu_custom_call.1} parent=1 // pred_region
      _
    $region9: #{tpu_custom_call.1} parent=1 // pred_fallthru
      _
    // Predicated region
    $region10: #{tpu_custom_call.1} parent=1 // pred_check
      _
    $region11: #{tpu_custom_call.1} parent=1 // pred_check_branch
      %14 = sbr.rel (0) target = $region13
    $region12: #{tpu_custom_call.1} parent=1 // pred_region
      _
    $region13: #{tpu_custom_call.1} parent=1 // pred_fallthru
      _
    %v15 = vld [vmem:[%s1] sm:$0xff]
    %v16 = vld [vmem:[%s2] sm:$0xff]
    %v17 = vld [vmem:[%s0] sm:$0xff]
    %v18 = vld [vmem:[%s0 + $0x8] sm:$0xff]
    %v19 = vld [vmem:[%s0 + $0x10] sm:$0xff]
    %v20 = vld [vmem:[%s0 + $0x18] sm:$0xff]
    %v21 = vld [vmem:[%s0 + $0x20] sm:$0xff]
    %v22 = vld [vmem:[%s0 + $0x28] sm:$0xff]
    %v23 = vld [vmem:[%s0 + $0x30] sm:$0xff]
    %v24 = vld [vmem:[%s0 + $0x38] sm:$0xff]
    %v25 = vld [vmem:[%s0 + $0x40] sm:$0xf]
    %v26 = vld [vmem:[%s0 + $0x48] sm:$0xf]
    %28 = vset.pattern.permute.xlu0 0
    %29 = vperm.xlu0 %28, %v16
    %v30 = vpop.permute.xlu0 %29
    %vm32 = vcmask 293888
    %v34 = vsel %vm32, %v15, 0
    %vm36 = vcmask 1043456
    %v38 = vsel %vm36, %v25, 0
    %v41 = vsel %vm36, %v26, 0
    %43 = vmatprep.subr.mxu0 %v18
    %44 = vmatpush1.msra.mxu0 %v17
    %45 = vmatprep.subr.mxu0 %v20
    %46 = vmatpush1.msra.mxu0 %v19
    %47 = vmatprep.subr.mxu0 %v22
    %48 = vmatpush1.msra.mxu0 %v21
    %49 = vmatprep.subr.mxu0 %v24
    %50 = vmatpush1.msra.mxu0 %v23
    %51 = vmatprep.subr.mxu0 %v41
    %52 = vmatpush1.msra.mxu0 %v38
    %53 = vmatprep.subr.mxu0 0.0
    %54 = vmatpush1.msra.mxu0 0.0
    %55 = vmatprep.subr.mxu0 0.0
    %56 = vmatpush1.msra.mxu0 0.0
    %57 = vmatprep.subr.mxu0 0.0
    %58 = vmatpush1.msra.mxu0 0.0
    %59 = vmatprep.subr.mxu0 0.0
    %60 = vmatpush1.msra.mxu0 0.0
    %61 = vmatprep.subr.mxu0 0.0
    %62 = vmatpush1.msra.mxu0 0.0
    %63 = vmatprep.subr.mxu0 0.0
    %64 = vmatpush1.msra.mxu0 0.0
    %65 = vmatprep.subr.mxu0 0.0
    %66 = vmatpush1.msra.mxu0 0.0
    %67 = vmatprep.subr.mxu0 0.0
    %68 = vmatpush1.msra.mxu0 0.0
    %69 = vmatprep.subr.mxu0 0.0
    %70 = vmatpush1.msra.mxu0 0.0
    %71 = vmatprep.subr.mxu0 0.0
    %72 = vmatpush1.msra.mxu0 0.0
    %73 = vmatprep.subr.mxu0 0.0
    %74 = vmatpush1.msra.mxu0 0.0
    %75 = vmatprep.subr.mxu0 0.0
    %76 = vmatpush1.msra.mxu0 0.0
    %77 = vmatprep.subr.mxu0 0.0
    %78 = vmatpush1.msra.mxu0 0.0
    %79 = vmatprep.subr.mxu0 0.0
    %80 = vmatpush1.msra.mxu0 0.0
    %81 = vmatprep.subr.mxu0 0.0
    %82 = vmatpush1.msra.mxu0 0.0
    %83 = vmatprep.subr.mxu0 0.0
    %84 = vmatpush1.msra.mxu0 0.0
    %85 = vmatprep.subr.mxu0 0.0
    %86 = vmatpush1.msra.mxu0 0.0
    %87 = vmatprep.subr.mxu0 0.0
    %88 = vmatpush1.msra.mxu0 0.0
    %89 = vmatprep.subr.mxu0 0.0
    %90 = vmatpush1.msra.mxu0 0.0
    %91 = vmatprep.subr.mxu0 0.0
    %92 = vmatpush1.msra.mxu0 0.0
    %93 = vmatprep.subr.mxu0 0.0
    %94 = vmatpush1.msra.mxu0 0.0
    %95 = vmatprep.subr.mxu0 0.0
    %96 = vmatpush1.msra.mxu0 0.0
    %97 = vmatprep.subr.mxu0 0.0
    %98 = vmatpush1.msra.mxu0 0.0
    %99 = vmatprep.subr.mxu0 0.0
    %100 = vmatpush1.msra.mxu0 0.0
    %101 = vmatprep.subr.mxu0 0.0
    %102 = vmatpush1.msra.mxu0 0.0
    %103 = vmatprep.subr.mxu0 0.0
    %104 = vmatpush1.msra.mxu0 0.0
    %105 = vmatprep.subr.mxu0 0.0
    %106 = vmatpush1.msra.mxu0 0.0
    %107 = vmatprep.mubr.f32.mxu0 0.0
    %108 = vmatmul.mubr.f32.gmra.mrb[0].mxu0 %v34
    %v109 = vpop.f32.mrb[0].mxu0
    %v110 = vadd.f32 %v30, %v109
    %v111 = vpop.f32.mrb[0].mxu0
    %v112 = vadd.f32 %v30, %v111
    %113 = vdwg.mxu0
    %114 = vst [vmem:[#allocation2] sm:$0xff] %v110
    %115 = vst [vmem:[#allocation2 + $0x8] sm:$0xff] %v112
    %s116 = scalar_lea.vmem %s0, 80
    %v117 = vld [vmem:[%s116] sm:$0xff]
    %v118 = vld [vmem:[%s116 + $0x8] sm:$0xff]
    %v119 = vld [vmem:[%s116 + $0x10] sm:$0xff]
    %v120 = vld [vmem:[%s116 + $0x18] sm:$0xff]
    %v121 = vld [vmem:[%s116 + $0x20] sm:$0xff]
    %v122 = vld [vmem:[%s116 + $0x28] sm:$0xff]
    %v123 = vld [vmem:[%s116 + $0x30] sm:$0xff]
    %v124 = vld [vmem:[%s116 + $0x38] sm:$0xff]
    %v125 = vld [vmem:[%s116 + $0x40] sm:$0xf]
    %v126 = vld [vmem:[%s116 + $0x48] sm:$0xf]
    %v128 = vsel %vm36, %v125, 0
    %v131 = vsel %vm36, %v126, 0
    %133 = vmatprep.subr.mxu0 %v118
    %134 = vmatpush1.msra.mxu0 %v117
    %135 = vmatprep.subr.mxu0 %v120
    %136 = vmatpush1.msra.mxu0 %v119
    %137 = vmatprep.subr.mxu0 %v122
    %138 = vmatpush1.msra.mxu0 %v121
    %139 = vmatprep.subr.mxu0 %v124
    %140 = vmatpush1.msra.mxu0 %v123
    %141 = vmatprep.subr.mxu0 %v131
    %142 = vmatpush1.msra.mxu0 %v128
    %143 = vmatprep.subr.mxu0 0.0
    %144 = vmatpush1.msra.mxu0 0.0
    %145 = vmatprep.subr.mxu0 0.0
    %146 = vmatpush1.msra.mxu0 0.0
    %147 = vmatprep.subr.mxu0 0.0
    %148 = vmatpush1.msra.mxu0 0.0
    %149 = vmatprep.subr.mxu0 0.0
    %150 = vmatpush1.msra.mxu0 0.0
    %151 = vmatprep.subr.mxu0 0.0
    %152 = vmatpush1.msra.mxu0 0.0
    %153 = vmatprep.subr.mxu0 0.0
    %154 = vmatpush1.msra.mxu0 0.0
    %155 = vmatprep.subr.mxu0 0.0
    %156 = vmatpush1.msra.mxu0 0.0
    %157 = vmatprep.subr.mxu0 0.0
    %158 = vmatpush1.msra.mxu0 0.0
    %159 = vmatprep.subr.mxu0 0.0
    %160 = vmatpush1.msra.mxu0 0.0
    %161 = vmatprep.subr.mxu0 0.0
    %162 = vmatpush1.msra.mxu0 0.0
    %163 = vmatprep.subr.mxu0 0.0
    %164 = vmatpush1.msra.mxu0 0.0
    %165 = vmatprep.subr.mxu0 0.0
    %166 = vmatpush1.msra.mxu0 0.0
    %167 = vmatprep.subr.mxu0 0.0
    %168 = vmatpush1.msra.mxu0 0.0
    %169 = vmatprep.subr.mxu0 0.0
    %170 = vmatpush1.msra.mxu0 0.0
    %171 = vmatprep.subr.mxu0 0.0
    %172 = vmatpush1.msra.mxu0 0.0
    %173 = vmatprep.subr.mxu0 0.0
    %174 = vmatpush1.msra.mxu0 0.0
    %175 = vmatprep.subr.mxu0 0.0
    %176 = vmatpush1.msra.mxu0 0.0
    %177 = vmatprep.subr.mxu0 0.0
    %178 = vmatpush1.msra.mxu0 0.0
    %179 = vmatprep.subr.mxu0 0.0
    %180 = vmatpush1.msra.mxu0 0.0
    %181 = vmatprep.subr.mxu0 0.0
    %182 = vmatpush1.msra.mxu0 0.0
    %183 = vmatprep.subr.mxu0 0.0
    %184 = vmatpush1.msra.mxu0 0.0
    %185 = vmatprep.subr.mxu0 0.0
    %186 = vmatpush1.msra.mxu0 0.0
    %187 = vmatprep.subr.mxu0 0.0
    %188 = vmatpush1.msra.mxu0 0.0
    %189 = vmatprep.subr.mxu0 0.0
    %190 = vmatpush1.msra.mxu0 0.0
    %191 = vmatprep.subr.mxu0 0.0
    %192 = vmatpush1.msra.mxu0 0.0
    %193 = vmatprep.subr.mxu0 0.0
    %194 = vmatpush1.msra.mxu0 0.0
    %195 = vmatprep.subr.mxu0 0.0
    %196 = vmatpush1.msra.mxu0 0.0
    %197 = vmatprep.mubr.f32.mxu0 0.0
    %198 = vmatmul.mubr.f32.gmra.mrb[0].mxu0 %v34
    %v199 = vpop.f32.mrb[0].mxu0
    %v200 = vadd.f32 %v30, %v199
    %v201 = vpop.f32.mrb[0].mxu0
    %v202 = vadd.f32 %v30, %v201
    %203 = vdwg.mxu0
    %s204 = scalar_lea.vmem [#allocation2], 16
    %205 = vst [vmem:[%s204] sm:$0xff] %v200
    %206 = vst [vmem:[%s204 + $0x8] sm:$0xff] %v202
    // Predicated region
    $region14: #{tpu_custom_call.1} parent=1 // pred_check
      _
    $region15: #{tpu_custom_call.1} parent=1 // pred_check_branch
      %208 = sbr.rel (0) target = $region17
    $region16: #{tpu_custom_call.1} parent=1 // pred_region
      %s210 = ssub.s32 512, 512
      %211 = vsyncadd [#allocation3], %s210
      %s212 = sshll.u32 [#allocation2], 4
      %s213 = int_to_ptr.vmem [resolvable:$true] %s212
      %218 = dma.vmem_to_hbm [thread:$0]  %s213, 512, %s3, [#allocation3], 256, 256, 16
    $region17: #{tpu_custom_call.1} parent=1 // pred_fallthru
      _
    // Predicated region
    $region18: #{tpu_custom_call.1} parent=1 // pred_check
      _
    $region19: #{tpu_custom_call.1} parent=1 // pred_check_branch
      %220 = sbr.rel (0) target = $region21
    $region20: #{tpu_custom_call.1} parent=1 // pred_region
      %221 = dma.done [#allocation3], 512
    $region21: #{tpu_custom_call.1} parent=1 // pred_fallthru
      _
    %222 = vsyncpa [#allocation3], 1

</llo_original>
